<compile_context>
chip_gen: v6e
topology: v6e:2x2x1
jax: 0.10.0
libtpu: 0.0.40
codegen_flags: <defaults>
</compile_context>

<pallas_src>
import math

import jax
import jax.numpy as jnp
from jax.experimental import pallas as pl
from jax.experimental.pallas import tpu as pltpu


def _round_up(x, m):
    return ((x + m - 1) // m) * m


# ---------------------------------------------------------------------------
# Kernel
# ---------------------------------------------------------------------------
def _ff_kernel(x_ref, w1_ref, b1_ref, w2_ref, b2_ref, o_ref, acc_ref):
    # x_ref : (tm, emb_p)   bf16      w1_ref: (emb_p, th)   bf16
    # b1_ref: (1, th)       f32       w2_ref: (th, emb_p)   bf16
    # b2_ref: (1, emb_p)    f32       o_ref : (tm, emb_p)   bf16
    # acc_ref: (tm, emb_p)  f32 VMEM scratch, resident across the hidden axis.
    k = pl.program_id(1)

    @pl.when(k == 0)
    def _():
        acc_ref[...] = jnp.zeros_like(acc_ref)

    # First linear for this hidden chunk (bf16 MXU operands, f32 accumulate).
    h = jnp.dot(x_ref[...], w1_ref[...], preferred_element_type=jnp.float32)
    h = h + b1_ref[...]

    # GELU (tanh approximation) in f32, matching the PyTorch reference:
    # 0.5 * x * (1 + tanh(sqrt(2/pi) * (x + 0.044715 * x^3)))
    c = jnp.float32(math.sqrt(2.0 / math.pi))
    g = 0.5 * h * (1.0 + jnp.tanh(c * (h + 0.044715 * (h * h * h))))

    # Second linear: accumulate this hidden chunk's contribution in f32.
    acc_ref[...] += jnp.dot(
        g.astype(w2_ref.dtype), w2_ref[...], preferred_element_type=jnp.float32
    )

    @pl.when(k == pl.num_programs(1) - 1)
    def _():
        o_ref[...] = (acc_ref[...] + b2_ref[...]).astype(o_ref.dtype)


# ---------------------------------------------------------------------------
# Device-dependent tile defaults & VMEM budget
# ---------------------------------------------------------------------------
def _device_info():
    kind = ""
    try:
        kind = jax.devices()[0].device_kind.lower()
    except Exception:
        pass
    vmem_phys = None
    try:
        vmem_phys = int(pltpu.get_tpu_info().vmem_capacity_bytes)
    except Exception:
        pass

    is_v7x = ("7x" in kind) or ("v7" in kind)
    if "v5 lite" in kind or "v5e" in kind or "v5litepod" in kind:
        tm_t, th_t, cap = 512, 1024, 104 << 20      # 128 MiB VMEM
    elif "v6" in kind:
        tm_t, th_t, cap = 1024, 1024, 104 << 20     # 918 TF/s vs 1.4 TB/s HBM
    elif is_v7x:
        tm_t, th_t, cap = 512, 512, 52 << 20        # 64 MiB per-TC VMEM
    else:
        tm_t, th_t, cap = 512, 512, 48 << 20        # conservative default
    if vmem_phys:
        cap = min(cap, int(0.8 * vmem_phys))
    return tm_t, th_t, cap, is_v7x


def _pick_th(hidden_p, target):
    """Largest multiple of 128 that divides hidden_p and is <= target."""
    t = (min(target, hidden_p) // 128) * 128
    while t >= 128:
        if hidden_p % t == 0:
            return t
        t -= 128
    return 128  # hidden_p is a multiple of 128, so this always divides


def _vmem_estimate(tm, th, emb_p):
    return (
        2 * tm * emb_p * 2        # x tile (bf16), double buffered
        + 2 * emb_p * th * 2      # W1 tile (bf16), double buffered
        + 2 * th * emb_p * 2      # W2 tile (bf16), double buffered
        + 2 * 8 * th * 4          # b1 block pads to 8 sublanes (f32)
        + 2 * 8 * emb_p * 4       # b2 block pads to 8 sublanes (f32)
        + 2 * tm * emb_p * 2      # output tile (bf16), counted x2 for safety
        + tm * emb_p * 4          # f32 accumulator scratch (single buffer)
    )


# ---------------------------------------------------------------------------
# Parameter preparation (hoisted out of the per-call path — cache the result)
# ---------------------------------------------------------------------------
def prepare_ff_params(w1, b1, w2, b2):
    """Pad feature dims to lane-dense multiples of 128 and cast weights to bf16.

    Zero padding is exactly neutral: gelu(0)=0 and zero weight rows/cols
    contribute nothing; padded output columns are sliced off in feed_forward.
    """
    emb, hidden = w1.shape
    assert w2.shape == (hidden, emb) and b1.shape == (hidden,) and b2.shape == (emb,)
    emb_p = _round_up(emb, 128)
    hidden_p = _round_up(hidden, 128)

    w1_p = w1.astype(jnp.bfloat16)
    w2_p = w2.astype(jnp.bfloat16)
    if emb_p != emb or hidden_p != hidden:
        w1_p = jnp.pad(w1_p, ((0, emb_p - emb), (0, hidden_p - hidden)))
        w2_p = jnp.pad(w2_p, ((0, hidden_p - hidden), (0, emb_p - emb)))
    b1_p = b1.astype(jnp.float32)
    b2_p = b2.astype(jnp.float32)
    if hidden_p != hidden:
        b1_p = jnp.pad(b1_p, (0, hidden_p - hidden))
    if emb_p != emb:
        b2_p = jnp.pad(b2_p, (0, emb_p - emb))

    return {
        "w1": w1_p, "b1": b1_p.reshape(1, hidden_p),
        "w2": w2_p, "b2": b2_p.reshape(1, emb_p),
        "emb": emb, "hidden": hidden, "emb_p": emb_p, "hidden_p": hidden_p,
    }


# ---------------------------------------------------------------------------
# Forward pass
# ---------------------------------------------------------------------------
def feed_forward_prepared(x, params, *, tm=None, th=None):
    """x: [batch, seq, emb]; params from prepare_ff_params. Returns [batch, seq, emb]."""
    batch, seq, emb = x.shape
    assert emb == params["emb"]
    emb_p, hidden_p = params["emb_p"], params["hidden_p"]
    hidden = params["hidden"]
    M = batch * seq

    tm_t, th_t, vmem_cap, is_v7x = _device_info()
    if tm is not None:
        tm_t = tm
    if th is not None:
        th_t = th
    if is_v7x and emb_p >= 8192:
        th_t = min(th_t, 256)

    # Row tile: big enough to amortize weight re-streaming (bytes/flop = 1/tm),
    # rounded for bf16 sublane packing / MXU layout, waste-aware for medium M.
    if M >= tm_t:
        tm = tm_t
        while tm > 256 and (_round_up(M, tm) - M) > tm // 2 and (tm // 2) % 128 == 0:
            tm //= 2
    elif M <= 128:
        tm = _round_up(max(M, 16), 16)
    else:
        tm = _round_up(M, 128)

    # Hidden tile: exact divisor of hidden_p (no wasted MXU width / weight DMA).
    th = _pick_th(hidden_p, th_t)

    # Shrink tiles until the double-buffered working set fits the VMEM budget.
    while _vmem_estimate(tm, th, emb_p) > vmem_cap:
        if tm > 256:
            tm = max(256, tm // 2)
        elif th > 128:
            th = _pick_th(hidden_p, max(128, th // 2))
        elif tm > 16:
            tm = max(16, (tm // 2 // 16) * 16 or 16)
        else:
            break

    # v7x has 2 TensorCores: make sure the "parallel" row axis has >= 2 tiles.
    if is_v7x and (_round_up(M, tm) // tm) < 2 and tm >= 256:
        tm //= 2

    m_p = _round_up(M, tm)
    grid = (m_p // tm, hidden_p // th)  # reduction (hidden) axis last
    grid_i = grid[0]

    # Activations: pad only if needed (padded rows are sliced off below).
    x2d = x.reshape(M, emb).astype(jnp.bfloat16)
    if m_p != M or emb_p != emb:
        x2d = jnp.pad(x2d, ((0, m_p - M), (0, emb_p - emb)))

    est = _vmem_estimate(tm, th, emb_p)
    vmem_limit = min(max(int(est * 1.3), 32 << 20), vmem_cap)

    cost = pl.CostEstimate(
        flops=4 * M * emb * hidden,          # two matmuls: 2 * (2*M*emb*hidden)
        transcendentals=M * hidden,          # one tanh per hidden activation
        bytes_accessed=(
            x2d.size * 2
            + grid_i * (params["w1"].size * 2 + params["w2"].size * 2
                        + params["b1"].size * 4 + params["b2"].size * 4)
            + m_p * emb_p * 2                # bf16 output writeback
        ),
    )

    out2d = pl.pallas_call(
        _ff_kernel,
        out_shape=jax.ShapeDtypeStruct((m_p, emb_p), jnp.bfloat16),
        grid_spec=pltpu.PrefetchScalarGridSpec(
            num_scalar_prefetch=0,
            grid=grid,
            in_specs=[
                pl.BlockSpec((tm, emb_p), lambda i, k: (i, 0)),   # x rows (resident over k)
                pl.BlockSpec((emb_p, th), lambda i, k: (0, k)),   # W1 hidden chunk
                pl.BlockSpec((1, th), lambda i, k: (0, k)),       # b1 hidden chunk
                pl.BlockSpec((th, emb_p), lambda i, k: (k, 0)),   # W2 hidden chunk
                pl.BlockSpec((1, emb_p), lambda i, k: (0, 0)),    # b2
            ],
            out_specs=pl.BlockSpec((tm, emb_p), lambda i, k: (i, 0)),
            scratch_shapes=[pltpu.VMEM((tm, emb_p), jnp.float32)],
        ),
        compiler_params=pltpu.CompilerParams(
            dimension_semantics=("parallel", "arbitrary"),
            vmem_limit_bytes=vmem_limit,
        ),
        cost_estimate=cost,
    )(x2d, params["w1"], params["b1"], params["w2"], params["b2"])

    out = out2d
    if m_p != M or emb_p != emb:
        out = out[:M, :emb]
    return out.astype(x.dtype).reshape(batch, seq, emb)


def feed_forward(x, w1, b1, w2, b2, *, tm=None, th=None):
    """Convenience one-shot wrapper (prefer caching prepare_ff_params)."""
    return feed_forward_prepared(x, prepare_ff_params(w1, b1, w2, b2), tm=tm, th=th)


# ---------------------------------------------------------------------------
# Reference + demo
# ---------------------------------------------------------------------------
def _reference(x, w1, b1, w2, b2):
    h = x @ w1 + b1
    c = jnp.sqrt(jnp.float32(2.0 / jnp.pi))
    g = 0.5 * h * (1.0 + jnp.tanh(c * (h + 0.044715 * h**3)))
    return g @ w2 + b2


if __name__ == "__main__":
    # Small shapes consistent with the module: config['emb_dim'] = 32.
    batch, seq, emb = 2, 8, 32
    hidden = 4 * emb

    key = jax.random.PRNGKey(0)
    kx, kw1, kb1, kw2, kb2 = jax.random.split(key, 5)

    x = jax.random.normal(kx, (batch, seq, emb), dtype=jnp.float32)
    # PyTorch Linear weight is (out, in); we store the transposed (in, out) layout
    # so the kernel computes y = x @ W + b directly on the MXU.
    w1 = jax.random.normal(kw1, (emb, hidden), dtype=jnp.float32) * 0.02
    b1 = jax.random.normal(kb1, (hidden,), dtype=jnp.float32) * 0.02
    w2 = jax.random.normal(kw2, (hidden, emb), dtype=jnp.float32) * 0.02
    b2 = jax.random.normal(kb2, (emb,), dtype=jnp.float32) * 0.02

    # Hoist the weight pad/cast out of the per-call path (done once, reusable).
    params = prepare_ff_params(w1, b1, w2, b2)
    out = jax.block_until_ready(feed_forward_prepared(x, params))

    ref = _reference(x, w1, b1, w2, b2)
    assert out.shape == (batch, seq, emb)
    # bf16 MXU operands + bf16 output with f32 accumulation -> loosened tolerance.
    assert jnp.allclose(out, ref, atol=1e-2, rtol=1e-2), "mismatch vs reference"

    print("KERNEL_OK")
</pallas_src>

<mosaic_0001>
module attributes {stable_mosaic.version = 11 : i64} {
  func.func @_ff_kernel(%arg0: i32, %arg1: i32, %arg2: memref<16x128xbf16, #tpu.memory_space<vmem>>, %arg3: memref<128x128xbf16, #tpu.memory_space<vmem>>, %arg4: memref<1x128xf32, #tpu.memory_space<vmem>>, %arg5: memref<128x128xbf16, #tpu.memory_space<vmem>>, %arg6: memref<1x128xf32, #tpu.memory_space<vmem>>, %arg7: memref<16x128xbf16, #tpu.memory_space<vmem>>, %arg8: memref<16x128xf32, #tpu.memory_space<vmem>>) attributes {dimension_semantics = [#tpu.dimension_semantics<parallel>, #tpu.dimension_semantics<arbitrary>], iteration_bounds = array<i64: 1, 1>, scalar_prefetch = 0 : i64, scratch_operands = 1 : i64, tpu.core_type = #tpu.core_type<tc>, window_params = [{transform_indices = @transform_0, window_bounds = array<i64: 16, 128>}, {transform_indices = @transform_1, window_bounds = array<i64: 128, 128>}, {transform_indices = @transform_2, window_bounds = array<i64: 1, 128>}, {transform_indices = @transform_3, window_bounds = array<i64: 128, 128>}, {pipeline_mode = #tpu.pipeline_mode<synchronous>, transform_indices = @transform_4, window_bounds = array<i64: 1, 128>}, {transform_indices = @transform_5, window_bounds = array<i64: 16, 128>}]} {
    %c0_i32 = arith.constant 0 : i32
    %0 = arith.cmpi eq, %arg1, %c0_i32 : i32
    %1 = arith.extui %0 : i1 to i32
    %c0_i32_0 = arith.constant 0 : i32
    %2 = arith.cmpi ne, %1, %c0_i32_0 : i32
    scf.if %2 {
      %cst_19 = arith.constant 0.000000e+00 : f32
      %31 = vector.broadcast %cst_19 : f32 to vector<16x128xf32>
      %c0_20 = arith.constant 0 : index
      %c0_21 = arith.constant 0 : index
      %32 = vector.load %arg8[%c0_20, %c0_21] : memref<16x128xf32, #tpu.memory_space<vmem>>, vector<16x128xf32>
      tpu.vector_store %arg8[%c0_20, %c0_21], %31 {strides = array<i32>} : memref<16x128xf32, #tpu.memory_space<vmem>>, vector<16x128xf32>,
    } else {
    }
    %c0 = arith.constant 0 : index
    %c0_1 = arith.constant 0 : index
    %3 = vector.load %arg2[%c0, %c0_1] : memref<16x128xbf16, #tpu.memory_space<vmem>>, vector<16x128xbf16>
    %c0_2 = arith.constant 0 : index
    %c0_3 = arith.constant 0 : index
    %4 = vector.load %arg3[%c0_2, %c0_3] : memref<128x128xbf16, #tpu.memory_space<vmem>>, vector<128x128xbf16>
    %cst = arith.constant dense<0.000000e+00> : vector<16x128xf32>
    %5 = tpu.matmul %3, %4, %cst {dimension_numbers = #tpu.dot_dimension_numbers<[1], [0], [0], [1], [0, 0, 1, 1], [], []>} : vector<16x128xbf16>, vector<128x128xbf16>, vector<16x128xf32> -> vector<16x128xf32>
    %c0_4 = arith.constant 0 : index
    %c0_5 = arith.constant 0 : index
    %6 = vector.load %arg4[%c0_4, %c0_5] : memref<1x128xf32, #tpu.memory_space<vmem>>, vector<1x128xf32>
    %7 = vector.broadcast %6 : vector<1x128xf32> to vector<16x128xf32>
    %8 = arith.addf %5, %7 : vector<16x128xf32>
    %cst_6 = arith.constant 5.000000e-01 : f32
    %9 = vector.broadcast %cst_6 : f32 to vector<16x128xf32>
    %10 = arith.mulf %9, %8 : vector<16x128xf32>
    %11 = arith.mulf %8, %8 : vector<16x128xf32>
    %12 = arith.mulf %11, %8 : vector<16x128xf32>
    %cst_7 = arith.constant 4.471500e-02 : f32
    %13 = vector.broadcast %cst_7 : f32 to vector<16x128xf32>
    %14 = arith.mulf %13, %12 : vector<16x128xf32>
    %15 = arith.addf %8, %14 : vector<16x128xf32>
    %cst_8 = arith.constant 0.797884583 : f32
    %16 = vector.broadcast %cst_8 : f32 to vector<16x128xf32>
    %17 = arith.mulf %16, %15 : vector<16x128xf32>
    %18 = math.tanh %17 : vector<16x128xf32>
    %cst_9 = arith.constant 1.000000e+00 : f32
    %19 = vector.broadcast %cst_9 : f32 to vector<16x128xf32>
    %20 = arith.addf %19, %18 : vector<16x128xf32>
    %21 = arith.mulf %10, %20 : vector<16x128xf32>
    %c0_10 = arith.constant 0 : index
    %c0_11 = arith.constant 0 : index
    %22 = vector.load %arg8[%c0_10, %c0_11] : memref<16x128xf32, #tpu.memory_space<vmem>>, vector<16x128xf32>
    %23 = arith.truncf %21 : vector<16x128xf32> to vector<16x128xbf16>
    %c0_12 = arith.constant 0 : index
    %c0_13 = arith.constant 0 : index
    %24 = vector.load %arg5[%c0_12, %c0_13] : memref<128x128xbf16, #tpu.memory_space<vmem>>, vector<128x128xbf16>
    %cst_14 = arith.constant dense<0.000000e+00> : vector<16x128xf32>
    %25 = tpu.matmul %23, %24, %cst_14 {dimension_numbers = #tpu.dot_dimension_numbers<[1], [0], [0], [1], [0, 0, 1, 1], [], []>} : vector<16x128xbf16>, vector<128x128xbf16>, vector<16x128xf32> -> vector<16x128xf32>
    %26 = arith.addf %22, %25 : vector<16x128xf32>
    %c0_15 = arith.constant 0 : index
    %c0_16 = arith.constant 0 : index
    %27 = vector.load %arg8[%c0_15, %c0_16] : memref<16x128xf32, #tpu.memory_space<vmem>>, vector<16x128xf32>
    tpu.vector_store %arg8[%c0_15, %c0_16], %26 {strides = array<i32>} : memref<16x128xf32, #tpu.memory_space<vmem>>, vector<16x128xf32>,
    %c0_i32_17 = arith.constant 0 : i32
    %28 = arith.cmpi eq, %arg1, %c0_i32_17 : i32
    %29 = arith.extui %28 : i1 to i32
    %c0_i32_18 = arith.constant 0 : i32
    %30 = arith.cmpi ne, %29, %c0_i32_18 : i32
    scf.if %30 {
      %c0_19 = arith.constant 0 : index
      %c0_20 = arith.constant 0 : index
      %31 = vector.load %arg8[%c0_19, %c0_20] : memref<16x128xf32, #tpu.memory_space<vmem>>, vector<16x128xf32>
      %c0_21 = arith.constant 0 : index
      %c0_22 = arith.constant 0 : index
      %32 = vector.load %arg6[%c0_21, %c0_22] : memref<1x128xf32, #tpu.memory_space<vmem>>, vector<1x128xf32>
      %33 = vector.broadcast %32 : vector<1x128xf32> to vector<16x128xf32>
      %34 = arith.addf %31, %33 : vector<16x128xf32>
      %35 = arith.truncf %34 : vector<16x128xf32> to vector<16x128xbf16>
      %c0_23 = arith.constant 0 : index
      %c0_24 = arith.constant 0 : index
      %36 = vector.load %arg7[%c0_23, %c0_24] : memref<16x128xbf16, #tpu.memory_space<vmem>>, vector<16x128xbf16>
      tpu.vector_store %arg7[%c0_23, %c0_24], %35 {strides = array<i32>} : memref<16x128xbf16, #tpu.memory_space<vmem>>, vector<16x128xbf16>,
    } else {
    }
    return
  }
  func.func @transform_0(%arg0: i32, %arg1: i32) -> (i32, i32) {
    %c0_i32 = arith.constant 0 : i32
    %c0_i32_0 = arith.constant 0 : i32
    return %arg0, %c0_i32 : i32, i32
  }
  func.func @transform_1(%arg0: i32, %arg1: i32) -> (i32, i32) {
    %c0_i32 = arith.constant 0 : i32
    %c0_i32_0 = arith.constant 0 : i32
    return %c0_i32, %arg1 : i32, i32
  }
  func.func @transform_2(%arg0: i32, %arg1: i32) -> (i32, i32) {
    %c0_i32 = arith.constant 0 : i32
    %c0_i32_0 = arith.constant 0 : i32
    return %c0_i32, %arg1 : i32, i32
  }
  func.func @transform_3(%arg0: i32, %arg1: i32) -> (i32, i32) {
    %c0_i32 = arith.constant 0 : i32
    %c0_i32_0 = arith.constant 0 : i32
    return %arg1, %c0_i32 : i32, i32
  }
  func.func @transform_4(%arg0: i32, %arg1: i32) -> (i32, i32) {
    %c0_i32 = arith.constant 0 : i32
    %c0_i32_0 = arith.constant 0 : i32
    %c0_i32_1 = arith.constant 0 : i32
    return %c0_i32, %c0_i32_0 : i32, i32
  }
  func.func @transform_5(%arg0: i32, %arg1: i32) -> (i32, i32) {
    %c0_i32 = arith.constant 0 : i32
    %c0_i32_0 = arith.constant 0 : i32
    return %arg0, %c0_i32 : i32, i32
  }
}

</mosaic_0001>

<llo_original>
// kernel: tpu_custom_call.1
$region0: #{tpu_custom_call.1}
  #allocation0 [shape = 'u32[]', space=smem, size = 0x4, offset = 0x4, fixed_abs, tag = 'smem constant byte address 0x4 - core index']
  #allocation1 [shape = 'u32[144,128]{1,0:T(1,128)}', space=vmem, size = 0x12000, scoped, tag = 'internal scratch']
  #allocation2 [shape = 'f32[16,128]{1,0:T(8,128)}', space=vmem, size = 0x2000, scoped, tag = 'scratch operand']
  %s0 = inlined_call_operand.hbm [shape: bf16[16,128], index: 0, kind: input, shape index: {}]
  %s1 = inlined_call_operand.hbm [shape: bf16[128,128], index: 1, kind: input, shape index: {}]
  %s2 = inlined_call_operand.vmem [shape: f32[1,128], index: 2, kind: input, shape index: {}]
  %s3 = inlined_call_operand.hbm [shape: bf16[128,128], index: 3, kind: input, shape index: {}]
  %s4 = inlined_call_operand.vmem [shape: f32[1,128], index: 4, kind: input, shape index: {}]
  %s5 = inlined_call_operand.hbm [shape: bf16[16,128], index: 5, kind: output, shape index: {}]
  %s6 = sld [smem:[#allocation0]]
  $region50: #{tpu_custom_call.1} parent=0
    _
  %s8 = ssub.s32 1, %s6
  %s9 = scalar_select 0, %s8, %s6
  $region1: #{tpu_custom_call.1} parent=0
    #allocation3 [shape = 'u8[4096]{0}', space=vmem, size = 0x1000, scoped, tag = 'input window, operand 0, single buffered']
    #allocation4 [shape = 's32[1]{0}', space=sflag, size = 0x4, scoped, tag = 'scoped memory for tpu_custom_call.1']
    #allocation5 [shape = 's32[1]{0}', space=sflag, size = 0x4, scoped, tag = 'scoped memory for tpu_custom_call.1']
    #allocation6 [shape = 'u8[32768]{0}', space=vmem, size = 0x8000, scoped, tag = 'input window, operand 1, single buffered']
    #allocation7 [shape = 's32[1]{0}', space=sflag, size = 0x4, scoped, tag = 'scoped memory for tpu_custom_call.1']
    #allocation8 [shape = 'u8[32768]{0}', space=vmem, size = 0x8000, scoped, tag = 'input window, operand 3, single buffered']
    #allocation9 [shape = 'u8[4096]{0}', space=vmem, size = 0x1000, scoped, tag = 'output window, operand 0, single buffered']
    %10 = vsyncpa [#allocation4], 0
    %11 = vsyncpa [#allocation7], 0
    %12 = vsyncpa [#allocation5], 0
    // Predicated region
    $region2: #{tpu_custom_call.1} parent=1 // pred_check
      _
    $region3: #{tpu_custom_call.1} parent=1 // pred_check_branch
      %14 = sbr.rel (0) target = $region5
    $region4: #{tpu_custom_call.1} parent=1 // pred_region
      %s16 = ssub.s32 128, 128
      %17 = vsyncadd [#allocation4], %s16
      %s18 = sshll.u32 [#allocation3], 4
      %s19 = int_to_ptr.vmem [resolvable:$true] %s18
      %24 = dma.hbm_to_vmem [thread:$0]  %s0, 128, %s19, [#allocation4], 64, 64, 4
    $region5: #{tpu_custom_call.1} parent=1 // pred_fallthru
      _
    // Predicated region
    $region6: #{tpu_custom_call.1} parent=1 // pred_check
      _
    $region7: #{tpu_custom_call.1} parent=1 // pred_check_branch
      %26 = sbr.rel (0) target = $region9
    $region8: #{tpu_custom_call.1} parent=1 // pred_region
      %s28 = ssub.s32 1024, 1024
      %29 = vsyncadd [#allocation7], %s28
      %s30 = sshll.u32 [#allocation6], 4
      %s31 = int_to_ptr.vmem [resolvable:$true] %s30
      %36 = dma.hbm_to_vmem [thread:$0]  %s1, 1024, %s31, [#allocation7], 64, 64, 4
    $region9: #{tpu_custom_call.1} parent=1 // pred_fallthru
      _
    // Predicated region
    $region10: #{tpu_custom_call.1} parent=1 // pred_check
      _
    $region11: #{tpu_custom_call.1} parent=1 // pred_check_branch
      %38 = sbr.rel (0) target = $region13
    $region12: #{tpu_custom_call.1} parent=1 // pred_region
      _
    $region13: #{tpu_custom_call.1} parent=1 // pred_fallthru
      _
    // Predicated region
    $region14: #{tpu_custom_call.1} parent=1 // pred_check
      _
    $region15: #{tpu_custom_call.1} parent=1 // pred_check_branch
      %40 = sbr.rel (0) target = $region17
    $region16: #{tpu_custom_call.1} parent=1 // pred_region
      %s42 = ssub.s32 1024, 1024
      %43 = vsyncadd [#allocation7], %s42
      %s44 = sshll.u32 [#allocation8], 4
      %s45 = int_to_ptr.vmem [resolvable:$true] %s44
      %50 = dma.hbm_to_vmem [thread:$0]  %s3, 1024, %s45, [#allocation7], 64, 64, 4
    $region17: #{tpu_custom_call.1} parent=1 // pred_fallthru
      _
    // Predicated region
    $region18: #{tpu_custom_call.1} parent=1 // pred_check
      _
    $region19: #{tpu_custom_call.1} parent=1 // pred_check_branch
      %52 = sbr.rel (0) target = $region21
    $region20: #{tpu_custom_call.1} parent=1 // pred_region
      _
    $region21: #{tpu_custom_call.1} parent=1 // pred_fallthru
      _
    // Predicated region
    $region22: #{tpu_custom_call.1} parent=1 // pred_check
      _
    $region23: #{tpu_custom_call.1} parent=1 // pred_check_branch
      %54 = sbr.rel (0) target = $region25
    $region24: #{tpu_custom_call.1} parent=1 // pred_region
      %55 = dma.done [#allocation4], 128
    $region25: #{tpu_custom_call.1} parent=1 // pred_fallthru
      _
    // Predicated region
    $region26: #{tpu_custom_call.1} parent=1 // pred_check
      _
    $region27: #{tpu_custom_call.1} parent=1 // pred_check_branch
      %57 = sbr.rel (0) target = $region29
    $region28: #{tpu_custom_call.1} parent=1 // pred_region
      %58 = dma.done [#allocation7], 1024
    $region29: #{tpu_custom_call.1} parent=1 // pred_fallthru
      _
    // Predicated region
    $region30: #{tpu_custom_call.1} parent=1 // pred_check
      _
    $region31: #{tpu_custom_call.1} parent=1 // pred_check_branch
      %60 = sbr.rel (0) target = $region33
    $region32: #{tpu_custom_call.1} parent=1 // pred_region
      %61 = dma.done [#allocation7], 1024
    $region33: #{tpu_custom_call.1} parent=1 // pred_fallthru
      _
    %p63 = scmp.eq.s32.totalorder 0, 0
    // Predicated region
    $region34: #{tpu_custom_call.1} parent=1 // pred_check
      %p64 = pneg %p63
    $region35: #{tpu_custom_call.1} parent=1 // pred_check_branch
      %66 = sbr.rel (%p64) target = $region37
    $region36: #{tpu_custom_call.1} parent=1 // pred_region
      %67 = vst [vmem:[#allocation2] sm:$0xff] 0.0
      %68 = vst [vmem:[#allocation2 + $0x8] sm:$0xff] 0.0
    $region37: #{tpu_custom_call.1} parent=1 // pred_fallthru
      _
    %v69 = vld [vmem:[#allocation3] sm:$0xf]
    %v70 = vld [vmem:[#allocation3 + $0x4] sm:$0xf]
    %v71 = vld [vmem:[#allocation6] sm:$0xf]
    %v72 = vld [vmem:[#allocation6 + $0x4] sm:$0xf]
    %v73 = vld [vmem:[#allocation6 + $0x8] sm:$0xf]
    %v74 = vld [vmem:[#allocation6 + $0xc] sm:$0xf]
    %v75 = vld [vmem:[#allocation6 + $0x10] sm:$0xf]
    %v76 = vld [vmem:[#allocation6 + $0x14] sm:$0xf]
    %v77 = vld [vmem:[#allocation6 + $0x18] sm:$0xf]
    %v78 = vld [vmem:[#allocation6 + $0x1c] sm:$0xf]
    %v79 = vld [vmem:[#allocation6 + $0x20] sm:$0xf]
    %v80 = vld [vmem:[#allocation6 + $0x24] sm:$0xf]
    %v81 = vld [vmem:[#allocation6 + $0x28] sm:$0xf]
    %v82 = vld [vmem:[#allocation6 + $0x2c] sm:$0xf]
    %v83 = vld [vmem:[#allocation6 + $0x30] sm:$0xf]
    %v84 = vld [vmem:[#allocation6 + $0x34] sm:$0xf]
    %v85 = vld [vmem:[#allocation6 + $0x38] sm:$0xf]
    %v86 = vld [vmem:[#allocation6 + $0x3c] sm:$0xf]
    %v87 = vld [vmem:[%s2] sm:$0x1]
    %v89 = vlaneseq
    %v90 = vshrl.u32 %v89, 7
    %v91 = vsub.s32 0, %v90
    %v92 = vrot.slane %v87, %v91
    %v96 = vunpack.c.l.b16 %v69
    %v97 = vunpack.c.l.b16 %v70
    %v98 = vpack.c.b16 %v97, %v96
    %v116 = vunpack.c.l.b16 %v71
    %v117 = vunpack.c.l.b16 %v72
    %v118 = vunpack.c.l.b16 %v73
    %v119 = vunpack.c.l.b16 %v74
    %v120 = vunpack.c.l.b16 %v75
    %v121 = vunpack.c.l.b16 %v76
    %v122 = vunpack.c.l.b16 %v77
    %v123 = vunpack.c.l.b16 %v78
    %v124 = vunpack.c.l.b16 %v79
    %v125 = vunpack.c.l.b16 %v80
    %v126 = vunpack.c.l.b16 %v81
    %v127 = vunpack.c.l.b16 %v82
    %v128 = vunpack.c.l.b16 %v83
    %v129 = vunpack.c.l.b16 %v84
    %v130 = vunpack.c.l.b16 %v85
    %v131 = vunpack.c.l.b16 %v86
    %v132 = vpack.c.b16 %v117, %v116
    %v133 = vpack.c.b16 %v119, %v118
    %v134 = vpack.c.b16 %v121, %v120
    %v135 = vpack.c.b16 %v123, %v122
    %v136 = vpack.c.b16 %v125, %v124
    %v137 = vpack.c.b16 %v127, %v126
    %v138 = vpack.c.b16 %v129, %v128
    %v139 = vpack.c.b16 %v131, %v130
    %148 = vmatprep.subr.bf16.mxu0 0
    %149 = vmatpush1.bf16.msra.mxu0 %v139
    %150 = vmatprep.subr.bf16.mxu0 0
    %151 = vmatpush1.bf16.msra.mxu0 %v138
    %152 = vmatprep.subr.bf16.mxu0 0
    %153 = vmatpush1.bf16.msra.mxu0 %v137
    %154 = vmatprep.subr.bf16.mxu0 0
    %155 = vmatpush1.bf16.msra.mxu0 %v136
    %156 = vmatprep.subr.bf16.mxu0 0
    %157 = vmatpush1.bf16.msra.mxu0 %v135
    %158 = vmatprep.subr.bf16.mxu0 0
    %159 = vmatpush1.bf16.msra.mxu0 %v134
    %160 = vmatprep.subr.bf16.mxu0 0
    %161 = vmatpush1.bf16.msra.mxu0 %v133
    %162 = vmatprep.subr.bf16.mxu0 0
    %163 = vmatpush1.bf16.msra.mxu0 %v132
    %164 = vmatprep.subr.bf16.mxu0 0
    %165 = vmatpush2.bf16.msra.mxu0 0
    %166 = vmatprep.subr.bf16.mxu0 0
    %167 = vmatpush2.bf16.msra.mxu0 0
    %168 = vmatprep.subr.bf16.mxu0 0
    %169 = vmatpush2.bf16.msra.mxu0 0
    %170 = vmatprep.subr.bf16.mxu0 0
    %171 = vmatpush2.bf16.msra.mxu0 0
    %172 = vmatprep.subr.bf16.mxu0 0
    %173 = vmatpush2.bf16.msra.mxu0 0
    %174 = vmatprep.subr.bf16.mxu0 0
    %175 = vmatpush2.bf16.msra.mxu0 0
    %176 = vmatprep.subr.bf16.mxu0 0
    %177 = vmatpush2.bf16.msra.mxu0 0
    %178 = vmatprep.subr.bf16.mxu0 0
    %179 = vmatpush2.bf16.msra.mxu0 0
    %180 = vmatprep.mubr.bf16.mxu0 0
    %181 = vmatmul.mubr.bf16.gmra.mxu0 %v98
    %v182 = vpop.f32.mrf.mxu0
    %v183 = vadd.f32 %v92, %v182
    %v184 = vpop.f32.mrf.mxu0
    %v185 = vpop.f32.mrf.mxu0
    %v186 = vadd.f32 %v92, %v185
    %v187 = vpop.f32.mrf.mxu0
    %188 = vdwg.mxu0
    %v189 = vmul.f32 %v183, 0.5
    %v190 = vmul.f32 %v186, 0.5
    %v191 = vmul.f32 %v183, %v183
    %v192 = vmul.f32 %v186, %v186
    %v193 = vmul.f32 %v191, %v183
    %v194 = vmul.f32 %v192, %v186
    %v195 = vmul.f32 %v193, 0.044715
    %v196 = vmul.f32 %v194, 0.044715
    %v197 = vadd.f32 %v183, %v195
    %v198 = vadd.f32 %v186, %v196
    %v199 = vmul.f32 %v197, 0.7978846
    %v200 = vmul.f32 %v198, 0.7978846
    %v201 = vtanh.pop %v199
    %v202 = vtanh.pop %v200
    %v203 = vadd.f32 %v201, 1.0
    %v204 = vadd.f32 %v202, 1.0
    %v205 = vmul.f32 %v189, %v203
    %v206 = vmul.f32 %v190, %v204
    %v207 = vld [vmem:[#allocation2] sm:$0xff]
    %v208 = vld [vmem:[#allocation2 + $0x8] sm:$0xff]
    %v209 = vpack.c.bf16 %v206, %v205
    %v210 = vld [vmem:[#allocation8] sm:$0xf]
    %v211 = vld [vmem:[#allocation8 + $0x4] sm:$0xf]
    %v212 = vld [vmem:[#allocation8 + $0x8] sm:$0xf]
    %v213 = vld [vmem:[#allocation8 + $0xc] sm:$0xf]
    %v214 = vld [vmem:[#allocation8 + $0x10] sm:$0xf]
    %v215 = vld [vmem:[#allocation8 + $0x14] sm:$0xf]
    %v216 = vld [vmem:[#allocation8 + $0x18] sm:$0xf]
    %v217 = vld [vmem:[#allocation8 + $0x1c] sm:$0xf]
    %v218 = vld [vmem:[#allocation8 + $0x20] sm:$0xf]
    %v219 = vld [vmem:[#allocation8 + $0x24] sm:$0xf]
    %v220 = vld [vmem:[#allocation8 + $0x28] sm:$0xf]
    %v221 = vld [vmem:[#allocation8 + $0x2c] sm:$0xf]
    %v222 = vld [vmem:[#allocation8 + $0x30] sm:$0xf]
    %v223 = vld [vmem:[#allocation8 + $0x34] sm:$0xf]
    %v224 = vld [vmem:[#allocation8 + $0x38] sm:$0xf]
    %v225 = vld [vmem:[#allocation8 + $0x3c] sm:$0xf]
    %v242 = vunpack.c.l.b16 %v210
    %v243 = vunpack.c.l.b16 %v211
    %v244 = vunpack.c.l.b16 %v212
    %v245 = vunpack.c.l.b16 %v213
    %v246 = vunpack.c.l.b16 %v214
    %v247 = vunpack.c.l.b16 %v215
    %v248 = vunpack.c.l.b16 %v216
    %v249 = vunpack.c.l.b16 %v217
    %v250 = vunpack.c.l.b16 %v218
    %v251 = vunpack.c.l.b16 %v219
    %v252 = vunpack.c.l.b16 %v220
    %v253 = vunpack.c.l.b16 %v221
    %v254 = vunpack.c.l.b16 %v222
    %v255 = vunpack.c.l.b16 %v223
    %v256 = vunpack.c.l.b16 %v224
    %v257 = vunpack.c.l.b16 %v225
    %v258 = vpack.c.b16 %v243, %v242
    %v259 = vpack.c.b16 %v245, %v244
    %v260 = vpack.c.b16 %v247, %v246
    %v261 = vpack.c.b16 %v249, %v248
    %v262 = vpack.c.b16 %v251, %v250
    %v263 = vpack.c.b16 %v253, %v252
    %v264 = vpack.c.b16 %v255, %v254
    %v265 = vpack.c.b16 %v257, %v256
    %274 = vmatprep.subr.bf16.mxu0 0
    %275 = vmatpush1.bf16.msra.mxu0 %v265
    %276 = vmatprep.subr.bf16.mxu0 0
    %277 = vmatpush1.bf16.msra.mxu0 %v264
    %278 = vmatprep.subr.bf16.mxu0 0
    %279 = vmatpush1.bf16.msra.mxu0 %v263
    %280 = vmatprep.subr.bf16.mxu0 0
    %281 = vmatpush1.bf16.msra.mxu0 %v262
    %282 = vmatprep.subr.bf16.mxu0 0
    %283 = vmatpush1.bf16.msra.mxu0 %v261
    %284 = vmatprep.subr.bf16.mxu0 0
    %285 = vmatpush1.bf16.msra.mxu0 %v260
    %286 = vmatprep.subr.bf16.mxu0 0
    %287 = vmatpush1.bf16.msra.mxu0 %v259
    %288 = vmatprep.subr.bf16.mxu0 0
    %289 = vmatpush1.bf16.msra.mxu0 %v258
    %290 = vmatprep.subr.bf16.mxu0 0
    %291 = vmatpush2.bf16.msra.mxu0 0
    %292 = vmatprep.subr.bf16.mxu0 0
    %293 = vmatpush2.bf16.msra.mxu0 0
    %294 = vmatprep.subr.bf16.mxu0 0
    %295 = vmatpush2.bf16.msra.mxu0 0
    %296 = vmatprep.subr.bf16.mxu0 0
    %297 = vmatpush2.bf16.msra.mxu0 0
    %298 = vmatprep.subr.bf16.mxu0 0
    %299 = vmatpush2.bf16.msra.mxu0 0
    %300 = vmatprep.subr.bf16.mxu0 0
    %301 = vmatpush2.bf16.msra.mxu0 0
    %302 = vmatprep.subr.bf16.mxu0 0
    %303 = vmatpush2.bf16.msra.mxu0 0
    %304 = vmatprep.subr.bf16.mxu0 0
    %305 = vmatpush2.bf16.msra.mxu0 0
    %306 = vmatprep.mubr.bf16.mxu0 0
    %307 = vmatmul.mubr.bf16.gmra.mxu0 %v209
    %v308 = vpop.f32.mrf.mxu0
    %v309 = vadd.f32 0.0, %v308
    %v310 = vpop.f32.mrf.mxu0
    %v311 = vpop.f32.mrf.mxu0
    %v312 = vadd.f32 0.0, %v311
    %v313 = vpop.f32.mrf.mxu0
    %314 = vdwg.mxu0
    %v315 = vadd.f32 %v207, %v309
    %v316 = vadd.f32 %v208, %v312
    %317 = vst [vmem:[#allocation2] sm:$0xff] %v315
    %318 = vst [vmem:[#allocation2 + $0x8] sm:$0xff] %v316
    // Predicated region
    $region38: #{tpu_custom_call.1} parent=1 // pred_check
      %p319 = pneg %p63
    $region39: #{tpu_custom_call.1} parent=1 // pred_check_branch
      %321 = sbr.rel (%p319) target = $region41
    $region40: #{tpu_custom_call.1} parent=1 // pred_region
      %v322 = vld [vmem:[#allocation2] sm:$0xff]
      %v323 = vld [vmem:[#allocation2 + $0x8] sm:$0xff]
      %v324 = vld [vmem:[%s4] sm:$0x1]
      %v326 = vlaneseq
      %v327 = vshrl.u32 %v326, 7
      %v328 = vsub.s32 0, %v327
      %v329 = vrot.slane %v324, %v328
      %v331 = vadd.f32 %v322, %v329
      %v332 = vadd.f32 %v323, %v329
      %v333 = vpack.c.bf16 %v332, %v331
      %v335 = vunpack.c.l.b16 %v333
      %v336 = vunpack.c.h.b16 %v333
      %v337 = vpack.c.b16 %v335, %v335
      %v338 = vpack.c.b16 %v336, %v336
      %341 = vst [vmem:[#allocation9] sm:$0xf] %v337
      %342 = vst [vmem:[#allocation9 + $0x4] sm:$0xf] %v338
    $region41: #{tpu_custom_call.1} parent=1 // pred_fallthru
      _
    // Predicated region
    $region42: #{tpu_custom_call.1} parent=1 // pred_check
      _
    $region43: #{tpu_custom_call.1} parent=1 // pred_check_branch
      %344 = sbr.rel (0) target = $region45
    $region44: #{tpu_custom_call.1} parent=1 // pred_region
      %s346 = ssub.s32 128, 128
      %347 = vsyncadd [#allocation5], %s346
      %s348 = sshll.u32 [#allocation9], 4
      %s349 = int_to_ptr.vmem [resolvable:$true] %s348
      %354 = dma.vmem_to_hbm [thread:$0]  %s349, 128, %s5, [#allocation5], 64, 64, 4
    $region45: #{tpu_custom_call.1} parent=1 // pred_fallthru
      _
    // Predicated region
    $region46: #{tpu_custom_call.1} parent=1 // pred_check
      _
    $region47: #{tpu_custom_call.1} parent=1 // pred_check_branch
      %356 = sbr.rel (0) target = $region49
    $region48: #{tpu_custom_call.1} parent=1 // pred_region
      %357 = dma.done [#allocation5], 128
    $region49: #{tpu_custom_call.1} parent=1 // pred_fallthru
      _
    %358 = vsyncpa [#allocation4], 1
    %359 = vsyncpa [#allocation7], 1
    %360 = vsyncpa [#allocation5], 1

</llo_original>
